<compile_context>
chip_gen: v6e
topology: v6e:2x2x1
jax: 0.10.0
libtpu: 0.0.40
codegen_flags: <defaults>
</compile_context>

<pallas_src>
import functools

import jax
import jax.numpy as jnp
from jax.experimental import pallas as pl
from jax.experimental.pallas import tpu as pltpu

_EPS = 1e-5
_TARGET_BLOCK_BYTES = 2 * 1024 * 1024   # per-block DMA target (v7x-safe VMEM)
_MAX_LANE_TILE = 1024                   # H*W tile (lane axis), multiple of 128
_MAX_C_TILE = 512                       # channel tile (sublane axis), mult of 8


def _pick_tile(size, max_tile, quantum):
    """Pick (tile, padded_size).

    tile is either the full dimension (always a legal BlockSpec block dim) or
    a multiple of `quantum` that divides padded_size.  Never returns the
    "whole huge array as one block" pathology.
    """
    if size <= max_tile:
        return size, size
    t = (max_tile // quantum) * quantum
    while t >= quantum:
        if size % t == 0:
            return t, size
        t -= quantum
    t = (max_tile // quantum) * quantum
    padded = ((size + t - 1) // t) * t
    return t, padded


# ---------------------------------------------------------------------------
# Kernel 1: per-channel sum / sum-of-squares reduction over (N, H*W).
# Finalize folds the affine: scale = gamma*invstd, shift = beta - mean*scale.
# Grid = (c_tiles, n_tiles, hw_tiles); reduction axes (n, hw) are last.
# ---------------------------------------------------------------------------
def _stats_kernel(x_ref, gamma_ref, beta_ref, scale_ref, shift_ref,
                  sum_sc, sq_sc, *, inv_count):
    ni = pl.program_id(1)
    hi = pl.program_id(2)

    @pl.when((ni == 0) & (hi == 0))
    def _():
        sum_sc[...] = jnp.zeros_like(sum_sc)
        sq_sc[...] = jnp.zeros_like(sq_sc)

    x = x_ref[...].astype(jnp.float32)                         # (nb, tc, thw)
    sum_sc[...] += jnp.sum(jnp.sum(x, axis=2, keepdims=True), axis=0)
    sq_sc[...] += jnp.sum(jnp.sum(x * x, axis=2, keepdims=True), axis=0)

    @pl.when((ni == pl.num_programs(1) - 1) & (hi == pl.num_programs(2) - 1))
    def _():
        mean = sum_sc[...] * inv_count
        var = sq_sc[...] * inv_count - mean * mean             # biased variance
        var = jnp.maximum(var, 0.0)                            # cancellation guard
        invstd = jax.lax.rsqrt(var + _EPS)
        scale = gamma_ref[...] * invstd
        scale_ref[...] = scale
        shift_ref[...] = beta_ref[...] - mean * scale


# ---------------------------------------------------------------------------
# Kernel 2: elementwise y = x * scale + shift  (per-channel scale/shift).
# ---------------------------------------------------------------------------
def _norm_kernel(x_ref, scale_ref, shift_ref, o_ref):
    x = x_ref[...].astype(jnp.float32)                         # (nb, tc, thw)
    o_ref[...] = (x * scale_ref[...] + shift_ref[...]).astype(o_ref.dtype)


@jax.jit
def _batchnorm2d_pallas(x_nchw, gamma, beta):
    """Training-mode BatchNorm2d over an NCHW tensor (no layout transposes)."""
    N, C, H, W = x_nchw.shape
    HW = H * W
    x3 = x_nchw.reshape(N, C, HW)                  # free view of NCHW layout

    tc, Cp = _pick_tile(C, _MAX_C_TILE, 8)
    thw, HWp = _pick_tile(HW, _MAX_LANE_TILE, 128)

    if Cp != C or HWp != HW:
        # Zero padding is exact for the statistics: zeros add nothing to the
        # sums and we divide by the true element count N*H*W.
        x3 = jnp.pad(x3, ((0, 0), (0, Cp - C), (0, HWp - HW)))

    gamma_f = gamma.astype(jnp.float32)
    beta_f = beta.astype(jnp.float32)
    if Cp != C:
        gamma_f = jnp.pad(gamma_f, (0, Cp - C), constant_values=1.0)
        beta_f = jnp.pad(beta_f, (0, Cp - C))
    gamma2 = gamma_f.reshape(Cp, 1)
    beta2 = beta_f.reshape(Cp, 1)

    itemsize = x3.dtype.itemsize
    nb = max(1, min(N, _TARGET_BLOCK_BYTES // max(tc * thw * itemsize, 1)))
    while N % nb != 0:                             # nb must tile N exactly
        nb -= 1

    c_tiles = Cp // tc
    n_tiles = N // nb
    hw_tiles = HWp // thw

    block_bytes = nb * tc * thw * itemsize
    # double-buffered in + out blocks + small per-channel operands + headroom;
    # clamped so it is safe on v7x's 64 MiB physical VMEM.
    vmem_limit = int(min(max(8 * block_bytes + (4 << 20), 16 << 20), 48 << 20))

    x_spec = pl.BlockSpec((nb, tc, thw), lambda ci, ni, hi: (ni, ci, hi))
    ch_spec = pl.BlockSpec((tc, 1), lambda ci, ni, hi: (ci, 0))

    # ---- pass 1: per-channel scale / shift ----
    # TODO(synk): on v7x a 2-way parallel partial-sum split of the (n, hw)
    # reduction would keep both TensorCores busy even when c_tiles == 1.
    scale, shift = pl.pallas_call(
        functools.partial(_stats_kernel, inv_count=1.0 / float(N * H * W)),
        out_shape=(
            jax.ShapeDtypeStruct((Cp, 1), jnp.float32),
            jax.ShapeDtypeStruct((Cp, 1), jnp.float32),
        ),
        grid_spec=pltpu.PrefetchScalarGridSpec(
            num_scalar_prefetch=0,
            grid=(c_tiles, n_tiles, hw_tiles),
            in_specs=[x_spec, ch_spec, ch_spec],
            out_specs=[ch_spec, ch_spec],
            scratch_shapes=[
                pltpu.VMEM((tc, 1), jnp.float32),
                pltpu.VMEM((tc, 1), jnp.float32),
            ],
        ),
        compiler_params=pltpu.CompilerParams(
            dimension_semantics=("parallel", "arbitrary", "arbitrary"),
            vmem_limit_bytes=vmem_limit,
        ),
    )(x3, gamma2, beta2)

    # ---- pass 2: y = x * scale + shift ----
    y3 = pl.pallas_call(
        _norm_kernel,
        out_shape=jax.ShapeDtypeStruct((N, Cp, HWp), x3.dtype),
        grid_spec=pltpu.PrefetchScalarGridSpec(
            num_scalar_prefetch=0,
            grid=(c_tiles, n_tiles, hw_tiles),
            in_specs=[x_spec, ch_spec, ch_spec],
            out_specs=x_spec,
        ),
        compiler_params=pltpu.CompilerParams(
            dimension_semantics=("parallel", "parallel", "parallel"),
            vmem_limit_bytes=vmem_limit,
        ),
    )(x3, scale, shift)

    if Cp != C or HWp != HW:
        y3 = y3[:, :C, :HW]
    return y3.reshape(N, C, H, W)


# ---------------------------------------------------------------------------
# SwitchableBatchNorm2d: list of BNs (one per width), forward picks one.
# ---------------------------------------------------------------------------
class SwitchableBatchNorm2d:
    def __init__(self, num_features_list, width_mult_list, width_mult, key):
        self.num_features_list = list(num_features_list)
        self.num_features = max(num_features_list)
        self.width_mult_list = list(width_mult_list)
        self.width_mult = width_mult
        # One (gamma, beta) pair per BN in the list, deterministic init.
        self.params = []
        for nf in self.num_features_list:
            key, k1, k2 = jax.random.split(key, 3)
            gamma = 1.0 + 0.1 * jax.random.normal(k1, (nf,), jnp.float32)
            beta = 0.1 * jax.random.normal(k2, (nf,), jnp.float32)
            self.params.append((gamma, beta))

    def __call__(self, x_nchw):
        idx = self.width_mult_list.index(self.width_mult)  # static switch
        gamma, beta = self.params[idx]
        assert x_nchw.shape[1] == self.num_features_list[idx]
        return _batchnorm2d_pallas(x_nchw, gamma, beta)


def _reference_bn(x, gamma, beta):
    # Pure-JAX reference (training-mode BatchNorm2d, NCHW).
    mean = jnp.mean(x, axis=(0, 2, 3), keepdims=True)
    var = jnp.mean((x - mean) ** 2, axis=(0, 2, 3), keepdims=True)
    g = gamma.reshape(1, -1, 1, 1)
    b = beta.reshape(1, -1, 1, 1)
    return (x - mean) * jax.lax.rsqrt(var + _EPS) * g + b


if __name__ == "__main__":
    key = jax.random.PRNGKey(0)
    kx, kp = jax.random.split(key)

    # cfg-equivalent settings: widths [0.5, 1.0] -> channel counts [2, 4],
    # active width_mult = 1.0 -> idx = 1 -> BN over 4 channels.
    num_features_list = [2, 4]
    width_mult_list = [0.5, 1.0]
    width_mult = 1.0

    sbn = SwitchableBatchNorm2d(num_features_list, width_mult_list,
                                width_mult, kp)

    x = jax.random.normal(kx, (2, 4, 16, 16), jnp.float32)  # NCHW

    y = sbn(x)
    jax.block_until_ready(y)

    # sanity check against pure-JAX reference
    idx = width_mult_list.index(width_mult)
    y_ref = _reference_bn(x, *sbn.params[idx])
    assert y.shape == x.shape and y.dtype == x.dtype
    assert jnp.max(jnp.abs(y - y_ref)) < 1e-4

    print("KERNEL_OK")
</pallas_src>

<mosaic_0001>
module attributes {stable_mosaic.version = 11 : i64} {
  func.func @_norm_kernel(%arg0: i32, %arg1: i32, %arg2: i32, %arg3: memref<2x4x256xf32, #tpu.memory_space<vmem>>, %arg4: memref<4x1xf32, #tpu.memory_space<vmem>>, %arg5: memref<4x1xf32, #tpu.memory_space<vmem>>, %arg6: memref<2x4x256xf32, #tpu.memory_space<vmem>>) attributes {dimension_semantics = [#tpu.dimension_semantics<parallel>, #tpu.dimension_semantics<parallel>, #tpu.dimension_semantics<parallel>], iteration_bounds = array<i64: 1, 1, 1>, scalar_prefetch = 0 : i64, scratch_operands = 0 : i64, tpu.core_type = #tpu.core_type<tc>, window_params = [{transform_indices = @transform_0, window_bounds = array<i64: 2, 4, 256>}, {transform_indices = @transform_1, window_bounds = array<i64: 4, 1>}, {transform_indices = @transform_2, window_bounds = array<i64: 4, 1>}, {transform_indices = @transform_3, window_bounds = array<i64: 2, 4, 256>}]} {
    %c0 = arith.constant 0 : index
    %c0_0 = arith.constant 0 : index
    %c0_1 = arith.constant 0 : index
    %0 = vector.load %arg3[%c0, %c0_0, %c0_1] : memref<2x4x256xf32, #tpu.memory_space<vmem>>, vector<2x4x256xf32>
    %c0_2 = arith.constant 0 : index
    %c0_3 = arith.constant 0 : index
    %1 = vector.load %arg4[%c0_2, %c0_3] : memref<4x1xf32, #tpu.memory_space<vmem>>, vector<4x1xf32>
    %2 = vector.shape_cast %1 : vector<4x1xf32> to vector<1x4x1xf32>
    %3 = vector.broadcast %2 : vector<1x4x1xf32> to vector<2x4x256xf32>
    %4 = arith.mulf %0, %3 : vector<2x4x256xf32>
    %c0_4 = arith.constant 0 : index
    %c0_5 = arith.constant 0 : index
    %5 = vector.load %arg5[%c0_4, %c0_5] : memref<4x1xf32, #tpu.memory_space<vmem>>, vector<4x1xf32>
    %6 = vector.shape_cast %5 : vector<4x1xf32> to vector<1x4x1xf32>
    %7 = vector.broadcast %6 : vector<1x4x1xf32> to vector<2x4x256xf32>
    %8 = arith.addf %4, %7 : vector<2x4x256xf32>
    %c0_6 = arith.constant 0 : index
    %c0_7 = arith.constant 0 : index
    %c0_8 = arith.constant 0 : index
    %9 = vector.load %arg6[%c0_6, %c0_7, %c0_8] : memref<2x4x256xf32, #tpu.memory_space<vmem>>, vector<2x4x256xf32>
    tpu.vector_store %arg6[%c0_6, %c0_7, %c0_8], %8 {strides = array<i32>} : memref<2x4x256xf32, #tpu.memory_space<vmem>>, vector<2x4x256xf32>,
    return
  }
  func.func @transform_0(%arg0: i32, %arg1: i32, %arg2: i32) -> (i32, i32, i32) {
    %c0_i32 = arith.constant 0 : i32
    return %arg1, %arg0, %arg2 : i32, i32, i32
  }
  func.func @transform_1(%arg0: i32, %arg1: i32, %arg2: i32) -> (i32, i32) {
    %c0_i32 = arith.constant 0 : i32
    %c0_i32_0 = arith.constant 0 : i32
    return %arg0, %c0_i32 : i32, i32
  }
  func.func @transform_2(%arg0: i32, %arg1: i32, %arg2: i32) -> (i32, i32) {
    %c0_i32 = arith.constant 0 : i32
    %c0_i32_0 = arith.constant 0 : i32
    return %arg0, %c0_i32 : i32, i32
  }
  func.func @transform_3(%arg0: i32, %arg1: i32, %arg2: i32) -> (i32, i32, i32) {
    %c0_i32 = arith.constant 0 : i32
    return %arg1, %arg0, %arg2 : i32, i32, i32
  }
}

module attributes {stable_mosaic.version = 11 : i64} {
  func.func @_stats_kernel(%arg0: i32, %arg1: i32, %arg2: i32, %arg3: memref<2x4x256xf32, #tpu.memory_space<vmem>>, %arg4: memref<4x1xf32, #tpu.memory_space<vmem>>, %arg5: memref<4x1xf32, #tpu.memory_space<vmem>>, %arg6: memref<4x1xf32, #tpu.memory_space<vmem>>, %arg7: memref<4x1xf32, #tpu.memory_space<vmem>>, %arg8: memref<4x1xf32, #tpu.memory_space<vmem>>, %arg9: memref<4x1xf32, #tpu.memory_space<vmem>>) attributes {dimension_semantics = [#tpu.dimension_semantics<parallel>, #tpu.dimension_semantics<arbitrary>, #tpu.dimension_semantics<arbitrary>], iteration_bounds = array<i64: 1, 1, 1>, scalar_prefetch = 0 : i64, scratch_operands = 2 : i64, tpu.core_type = #tpu.core_type<tc>, window_params = [{transform_indices = @transform_0, window_bounds = array<i64: 2, 4, 256>}, {transform_indices = @transform_1, window_bounds = array<i64: 4, 1>}, {transform_indices = @transform_2, window_bounds = array<i64: 4, 1>}, {transform_indices = @transform_3, window_bounds = array<i64: 4, 1>}, {transform_indices = @transform_4, window_bounds = array<i64: 4, 1>}]} {
    %c0_i32 = arith.constant 0 : i32
    %0 = arith.cmpi eq, %arg1, %c0_i32 : i32
    %c0_i32_0 = arith.constant 0 : i32
    %1 = arith.cmpi eq, %arg2, %c0_i32_0 : i32
    %2 = arith.andi %0, %1 : i1
    %3 = arith.extui %2 : i1 to i32
    %c0_i32_1 = arith.constant 0 : i32
    %4 = arith.cmpi ne, %3, %c0_i32_1 : i32
    scf.if %4 {
      %cst_18 = arith.constant 0.000000e+00 : f32
      %24 = vector.broadcast %cst_18 : f32 to vector<4x1xf32>
      %c0_19 = arith.constant 0 : index
      %c0_20 = arith.constant 0 : index
      %25 = vector.load %arg8[%c0_19, %c0_20] : memref<4x1xf32, #tpu.memory_space<vmem>>, vector<4x1xf32>
      tpu.vector_store %arg8[%c0_19, %c0_20], %24 {strides = array<i32>} : memref<4x1xf32, #tpu.memory_space<vmem>>, vector<4x1xf32>,
      %cst_21 = arith.constant 0.000000e+00 : f32
      %26 = vector.broadcast %cst_21 : f32 to vector<4x1xf32>
      %c0_22 = arith.constant 0 : index
      %c0_23 = arith.constant 0 : index
      %27 = vector.load %arg9[%c0_22, %c0_23] : memref<4x1xf32, #tpu.memory_space<vmem>>, vector<4x1xf32>
      tpu.vector_store %arg9[%c0_22, %c0_23], %26 {strides = array<i32>} : memref<4x1xf32, #tpu.memory_space<vmem>>, vector<4x1xf32>,
    } else {
    }
    %c0 = arith.constant 0 : index
    %c0_2 = arith.constant 0 : index
    %c0_3 = arith.constant 0 : index
    %5 = vector.load %arg3[%c0, %c0_2, %c0_3] : memref<2x4x256xf32, #tpu.memory_space<vmem>>, vector<2x4x256xf32>
    %c0_4 = arith.constant 0 : index
    %c0_5 = arith.constant 0 : index
    %6 = vector.load %arg8[%c0_4, %c0_5] : memref<4x1xf32, #tpu.memory_space<vmem>>, vector<4x1xf32>
    %cst = arith.constant dense<0.000000e+00> : vector<2x4xf32>
    %7 = vector.multi_reduction <add>, %5, %cst [2] : vector<2x4x256xf32> to vector<2x4xf32>
    %8 = vector.shape_cast %7 : vector<2x4xf32> to vector<2x4x1xf32>
    %cst_6 = arith.constant dense<0.000000e+00> : vector<4x1xf32>
    %9 = vector.multi_reduction <add>, %8, %cst_6 [0] : vector<2x4x1xf32> to vector<4x1xf32>
    %10 = arith.addf %6, %9 : vector<4x1xf32>
    %c0_7 = arith.constant 0 : index
    %c0_8 = arith.constant 0 : index
    %11 = vector.load %arg8[%c0_7, %c0_8] : memref<4x1xf32, #tpu.memory_space<vmem>>, vector<4x1xf32>
    tpu.vector_store %arg8[%c0_7, %c0_8], %10 {strides = array<i32>} : memref<4x1xf32, #tpu.memory_space<vmem>>, vector<4x1xf32>,
    %c0_9 = arith.constant 0 : index
    %c0_10 = arith.constant 0 : index
    %12 = vector.load %arg9[%c0_9, %c0_10] : memref<4x1xf32, #tpu.memory_space<vmem>>, vector<4x1xf32>
    %13 = arith.mulf %5, %5 : vector<2x4x256xf32>
    %cst_11 = arith.constant dense<0.000000e+00> : vector<2x4xf32>
    %14 = vector.multi_reduction <add>, %13, %cst_11 [2] : vector<2x4x256xf32> to vector<2x4xf32>
    %15 = vector.shape_cast %14 : vector<2x4xf32> to vector<2x4x1xf32>
    %cst_12 = arith.constant dense<0.000000e+00> : vector<4x1xf32>
    %16 = vector.multi_reduction <add>, %15, %cst_12 [0] : vector<2x4x1xf32> to vector<4x1xf32>
    %17 = arith.addf %12, %16 : vector<4x1xf32>
    %c0_13 = arith.constant 0 : index
    %c0_14 = arith.constant 0 : index
    %18 = vector.load %arg9[%c0_13, %c0_14] : memref<4x1xf32, #tpu.memory_space<vmem>>, vector<4x1xf32>
    tpu.vector_store %arg9[%c0_13, %c0_14], %17 {strides = array<i32>} : memref<4x1xf32, #tpu.memory_space<vmem>>, vector<4x1xf32>,
    %c0_i32_15 = arith.constant 0 : i32
    %19 = arith.cmpi eq, %arg1, %c0_i32_15 : i32
    %c0_i32_16 = arith.constant 0 : i32
    %20 = arith.cmpi eq, %arg2, %c0_i32_16 : i32
    %21 = arith.andi %19, %20 : i1
    %22 = arith.extui %21 : i1 to i32
    %c0_i32_17 = arith.constant 0 : i32
    %23 = arith.cmpi ne, %22, %c0_i32_17 : i32
    scf.if %23 {
      %c0_18 = arith.constant 0 : index
      %c0_19 = arith.constant 0 : index
      %24 = vector.load %arg8[%c0_18, %c0_19] : memref<4x1xf32, #tpu.memory_space<vmem>>, vector<4x1xf32>
      %cst_20 = arith.constant 0.001953125 : f32
      %25 = vector.broadcast %cst_20 : f32 to vector<4x1xf32>
      %26 = arith.mulf %24, %25 : vector<4x1xf32>
      %c0_21 = arith.constant 0 : index
      %c0_22 = arith.constant 0 : index
      %27 = vector.load %arg9[%c0_21, %c0_22] : memref<4x1xf32, #tpu.memory_space<vmem>>, vector<4x1xf32>
      %cst_23 = arith.constant 0.001953125 : f32
      %28 = vector.broadcast %cst_23 : f32 to vector<4x1xf32>
      %29 = arith.mulf %27, %28 : vector<4x1xf32>
      %30 = arith.mulf %26, %26 : vector<4x1xf32>
      %31 = arith.subf %29, %30 : vector<4x1xf32>
      %cst_24 = arith.constant 0.000000e+00 : f32
      %32 = vector.broadcast %cst_24 : f32 to vector<4x1xf32>
      %33 = arith.maximumf %31, %32 : vector<4x1xf32>
      %cst_25 = arith.constant 9.99999974E-6 : f32
      %34 = vector.broadcast %cst_25 : f32 to vector<4x1xf32>
      %35 = arith.addf %33, %34 : vector<4x1xf32>
      %36 = math.rsqrt %35 : vector<4x1xf32>
      %c0_26 = arith.constant 0 : index
      %c0_27 = arith.constant 0 : index
      %37 = vector.load %arg4[%c0_26, %c0_27] : memref<4x1xf32, #tpu.memory_space<vmem>>, vector<4x1xf32>
      %38 = arith.mulf %37, %36 : vector<4x1xf32>
      %c0_28 = arith.constant 0 : index
      %c0_29 = arith.constant 0 : index
      %39 = vector.load %arg6[%c0_28, %c0_29] : memref<4x1xf32, #tpu.memory_space<vmem>>, vector<4x1xf32>
      tpu.vector_store %arg6[%c0_28, %c0_29], %38 {strides = array<i32>} : memref<4x1xf32, #tpu.memory_space<vmem>>, vector<4x1xf32>,
      %c0_30 = arith.constant 0 : index
      %c0_31 = arith.constant 0 : index
      %40 = vector.load %arg5[%c0_30, %c0_31] : memref<4x1xf32, #tpu.memory_space<vmem>>, vector<4x1xf32>
      %41 = arith.mulf %26, %38 : vector<4x1xf32>
      %42 = arith.subf %40, %41 : vector<4x1xf32>
      %c0_32 = arith.constant 0 : index
      %c0_33 = arith.constant 0 : index
      %43 = vector.load %arg7[%c0_32, %c0_33] : memref<4x1xf32, #tpu.memory_space<vmem>>, vector<4x1xf32>
      tpu.vector_store %arg7[%c0_32, %c0_33], %42 {strides = array<i32>} : memref<4x1xf32, #tpu.memory_space<vmem>>, vector<4x1xf32>,
    } else {
    }
    return
  }
  func.func @transform_0(%arg0: i32, %arg1: i32, %arg2: i32) -> (i32, i32, i32) {
    %c0_i32 = arith.constant 0 : i32
    return %arg1, %arg0, %arg2 : i32, i32, i32
  }
  func.func @transform_1(%arg0: i32, %arg1: i32, %arg2: i32) -> (i32, i32) {
    %c0_i32 = arith.constant 0 : i32
    %c0_i32_0 = arith.constant 0 : i32
    return %arg0, %c0_i32 : i32, i32
  }
  func.func @transform_2(%arg0: i32, %arg1: i32, %arg2: i32) -> (i32, i32) {
    %c0_i32 = arith.constant 0 : i32
    %c0_i32_0 = arith.constant 0 : i32
    return %arg0, %c0_i32 : i32, i32
  }
  func.func @transform_3(%arg0: i32, %arg1: i32, %arg2: i32) -> (i32, i32) {
    %c0_i32 = arith.constant 0 : i32
    %c0_i32_0 = arith.constant 0 : i32
    return %arg0, %c0_i32 : i32, i32
  }
  func.func @transform_4(%arg0: i32, %arg1: i32, %arg2: i32) -> (i32, i32) {
    %c0_i32 = arith.constant 0 : i32
    %c0_i32_0 = arith.constant 0 : i32
    return %arg0, %c0_i32 : i32, i32
  }
}

</mosaic_0001>

<llo_original>
// kernel: _batchnorm2d_pallas.3
$region0: #{_batchnorm2d_pallas.3}
  #allocation0 [shape = 'u32[]', space=smem, size = 0x4, offset = 0x4, fixed_abs, tag = 'smem constant byte address 0x4 - core index']
  #allocation1 [shape = 'u32[144,128]{1,0:T(1,128)}', space=vmem, size = 0x12000, scoped, tag = 'internal scratch']
  %s0 = inlined_call_operand.vmem [shape: f32[2,4,256], index: 0, kind: input, shape index: {}]
  %s1 = inlined_call_operand.vmem [shape: f32[4,1], index: 1, kind: input, shape index: {}]
  %s2 = inlined_call_operand.vmem [shape: f32[4,1], index: 2, kind: input, shape index: {}]
  %s3 = inlined_call_operand.vmem [shape: f32[2,4,256], index: 3, kind: output, shape index: {}]
  %s4 = sld [smem:[#allocation0]]
  $region22: #{_batchnorm2d_pallas.3} parent=0
    _
  %s6 = ssub.s32 1, %s4
  %s7 = scalar_select 0, %s6, %s4
  // Predicated region
  $region2: #{_batchnorm2d_pallas.3} parent=0 // pred_check
    _
  $region3: #{_batchnorm2d_pallas.3} parent=0 // pred_check_branch
    %9 = sbr.rel (0) target = $region5
  $region4: #{_batchnorm2d_pallas.3} parent=0 // pred_region
    _
  $region5: #{_batchnorm2d_pallas.3} parent=0 // pred_fallthru
    _
  // Predicated region
  $region6: #{_batchnorm2d_pallas.3} parent=0 // pred_check
    _
  $region7: #{_batchnorm2d_pallas.3} parent=0 // pred_check_branch
    %11 = sbr.rel (0) target = $region9
  $region8: #{_batchnorm2d_pallas.3} parent=0 // pred_region
    _
  $region9: #{_batchnorm2d_pallas.3} parent=0 // pred_fallthru
    _
  // Predicated region
  $region10: #{_batchnorm2d_pallas.3} parent=0 // pred_check
    _
  $region11: #{_batchnorm2d_pallas.3} parent=0 // pred_check_branch
    %13 = sbr.rel (0) target = $region13
  $region12: #{_batchnorm2d_pallas.3} parent=0 // pred_region
    _
  $region13: #{_batchnorm2d_pallas.3} parent=0 // pred_fallthru
    _
  %v14 = vld [vmem:[%s0] sm:$0xff]
  %v15 = vld [vmem:[%s0 + $0x8] sm:$0xff]
  %v16 = vld [vmem:[%s1] sm:$0xf]
  %18 = vset.pattern.permute.xlu0 0
  %19 = vperm.xlu0 %18, %v16
  %v20 = vpop.permute.xlu0 %19
  %v22 = vunpack.c.l.s4 839922192
  %v23 = vunpack.c.0.s8 %v22
  %v24 = vlaneseq
  %v25 = vshrl.u32 %v24, 7
  %v26 = vsub.s32 %v23, %v25
  %v27 = vrot.slane %v20, %v26
  %v29 = vmul.f32 %v14, %v27
  %v30 = vmul.f32 %v15, %v27
  %v31 = vld [vmem:[%s2] sm:$0xf]
  %33 = vset.pattern.permute.xlu0 0
  %34 = vperm.xlu0 %33, %v31
  %v35 = vpop.permute.xlu0 %34
  %v37 = vunpack.c.l.s4 839922192
  %v38 = vunpack.c.0.s8 %v37
  %v39 = vlaneseq
  %v40 = vshrl.u32 %v39, 7
  %v41 = vsub.s32 %v38, %v40
  %v42 = vrot.slane %v35, %v41
  %v44 = vadd.f32 %v29, %v42
  %v45 = vadd.f32 %v30, %v42
  %46 = vst [vmem:[%s3] sm:$0xff] %v44
  %47 = vst [vmem:[%s3 + $0x8] sm:$0xff] %v45
  // Predicated region
  $region14: #{_batchnorm2d_pallas.3} parent=0 // pred_check
    _
  $region15: #{_batchnorm2d_pallas.3} parent=0 // pred_check_branch
    %49 = sbr.rel (0) target = $region17
  $region16: #{_batchnorm2d_pallas.3} parent=0 // pred_region
    _
  $region17: #{_batchnorm2d_pallas.3} parent=0 // pred_fallthru
    _
  // Predicated region
  $region18: #{_batchnorm2d_pallas.3} parent=0 // pred_check
    _
  $region19: #{_batchnorm2d_pallas.3} parent=0 // pred_check_branch
    %51 = sbr.rel (0) target = $region21
  $region20: #{_batchnorm2d_pallas.3} parent=0 // pred_region
    _
  $region21: #{_batchnorm2d_pallas.3} parent=0 // pred_fallthru
    _

// kernel: _batchnorm2d_pallas.2
$region0: #{_batchnorm2d_pallas.2}
  #allocation0 [shape = 'u32[]', space=smem, size = 0x4, offset = 0x4, fixed_abs, tag = 'smem constant byte address 0x4 - core index']
  #allocation1 [shape = 'u32[144,128]{1,0:T(1,128)}', space=vmem, size = 0x12000, scoped, tag = 'internal scratch']
  #allocation2 [shape = 'f32[4,1]{1,0:T(4,128)}', space=vmem, size = 0x800, scoped, tag = 'scratch operand']
  #allocation3 [shape = 'f32[4,1]{1,0:T(4,128)}', space=vmem, size = 0x800, scoped, tag = 'scratch operand']
  %s0 = inlined_call_operand.vmem [shape: f32[2,4,256], index: 0, kind: input, shape index: {}]
  %s1 = inlined_call_operand.vmem [shape: f32[4,1], index: 1, kind: input, shape index: {}]
  %s2 = inlined_call_operand.vmem [shape: f32[4,1], index: 2, kind: input, shape index: {}]
  %s3 = inlined_call_operand.vmem [shape: f32[4,1], index: 3, kind: output, shape index: {0}]
  %s4 = inlined_call_operand.vmem [shape: f32[4,1], index: 4, kind: output, shape index: {1}]
  %5 = xla_tuple %s3, %s4
  %s6 = sld [smem:[#allocation0]]
  $region38: #{_batchnorm2d_pallas.2} parent=0
    _
  %s8 = ssub.s32 1, %s6
  %s9 = scalar_select 0, %s8, %s6
  // Predicated region
  $region2: #{_batchnorm2d_pallas.2} parent=0 // pred_check
    _
  $region3: #{_batchnorm2d_pallas.2} parent=0 // pred_check_branch
    %11 = sbr.rel (0) target = $region5
  $region4: #{_batchnorm2d_pallas.2} parent=0 // pred_region
    _
  $region5: #{_batchnorm2d_pallas.2} parent=0 // pred_fallthru
    _
  // Predicated region
  $region6: #{_batchnorm2d_pallas.2} parent=0 // pred_check
    _
  $region7: #{_batchnorm2d_pallas.2} parent=0 // pred_check_branch
    %13 = sbr.rel (0) target = $region9
  $region8: #{_batchnorm2d_pallas.2} parent=0 // pred_region
    _
  $region9: #{_batchnorm2d_pallas.2} parent=0 // pred_fallthru
    _
  // Predicated region
  $region10: #{_batchnorm2d_pallas.2} parent=0 // pred_check
    _
  $region11: #{_batchnorm2d_pallas.2} parent=0 // pred_check_branch
    %15 = sbr.rel (0) target = $region13
  $region12: #{_batchnorm2d_pallas.2} parent=0 // pred_region
    _
  $region13: #{_batchnorm2d_pallas.2} parent=0 // pred_fallthru
    _
  %p16 = scmp.eq.s32.totalorder 0, 0
  %p17 = scmp.eq.s32.totalorder 0, 0
  %p18 = pnand %p16, %p17
  %p19 = pneg %p18
  // Predicated region
  $region14: #{_batchnorm2d_pallas.2} parent=0 // pred_check
    _
  $region15: #{_batchnorm2d_pallas.2} parent=0 // pred_check_branch
    %21 = sbr.rel (%p18) target = $region17
  $region16: #{_batchnorm2d_pallas.2} parent=0 // pred_region
    %vm22 = vcmask 3072
    %23 = vst.msk [vmem:[#allocation2] sm:$0xf] %vm22, 0.0
    %24 = vst.msk [vmem:[#allocation3] sm:$0xf] %vm22, 0.0
  $region17: #{_batchnorm2d_pallas.2} parent=0 // pred_fallthru
    _
  %v25 = vld [vmem:[%s0] sm:$0xff]
  %v26 = vld [vmem:[%s0 + $0x8] sm:$0xff]
  %v27 = vld [vmem:[#allocation2] sm:$0xf]
  %v30 = vcombine.high %v25, %v25
  %v31 = vcombine.high %v26, %v26
  %vm34 = vcmask 1043456
  %v35 = vsel %vm34, %v25, 0.0
  %v36 = vsel %vm34, %v30, 0.0
  %v37 = vadd.f32 %v35, %v36
  %38 = vadd.xlane.f32.xlu0 %v37
  %v39 = vpop.xlane.xlu0 %38
  %v40 = vsel %vm34, %v26, 0.0
  %v41 = vsel %vm34, %v31, 0.0
  %v42 = vadd.f32 %v40, %v41
  %43 = vadd.xlane.f32.xlu0 %v42
  %v44 = vpop.xlane.xlu0 %43
  %v45 = vsel %vm34, %v39, 0.0
  %v46 = vsel %vm34, %v44, 0.0
  %v47 = vadd.f32 %v45, %v46
  %v48 = vadd.f32 %v27, %v47
  %vm49 = vcmask 3072
  %50 = vst.msk [vmem:[#allocation2] sm:$0xf] %vm49, %v48
  %v51 = vld [vmem:[#allocation3] sm:$0xf]
  %v52 = vmul.f32 %v25, %v25
  %v53 = vmul.f32 %v26, %v26
  %v56 = vcombine.high %v52, %v52
  %v57 = vcombine.high %v53, %v53
  %v60 = vsel %vm34, %v52, 0.0
  %v61 = vsel %vm34, %v56, 0.0
  %v62 = vadd.f32 %v60, %v61
  %63 = vadd.xlane.f32.xlu0 %v62
  %v64 = vpop.xlane.xlu0 %63
  %v65 = vsel %vm34, %v53, 0.0
  %v66 = vsel %vm34, %v57, 0.0
  %v67 = vadd.f32 %v65, %v66
  %68 = vadd.xlane.f32.xlu0 %v67
  %v69 = vpop.xlane.xlu0 %68
  %v70 = vsel %vm34, %v64, 0.0
  %v71 = vsel %vm34, %v69, 0.0
  %v72 = vadd.f32 %v70, %v71
  %v73 = vadd.f32 %v51, %v72
  %74 = vst.msk [vmem:[#allocation3] sm:$0xf] %vm49, %v73
  // Predicated region
  $region18: #{_batchnorm2d_pallas.2} parent=0 // pred_check
    _
  $region19: #{_batchnorm2d_pallas.2} parent=0 // pred_check_branch
    %76 = sbr.rel (%p18) target = $region21
  $region20: #{_batchnorm2d_pallas.2} parent=0 // pred_region
    %v77 = vld [vmem:[#allocation2] sm:$0xf]
    %v78 = vmul.f32 %v77, 0.001953125
    %v79 = vld [vmem:[#allocation3] sm:$0xf]
    %v80 = vmul.f32 %v79, 0.001953125
    %v81 = vmul.f32 %v78, %v78
    %v82 = vsub.f32 %v80, %v81
    %v83 = vmax.f32 %v82, 0.0
    %v84 = vadd.f32 %v83, 1e-05
    %v85 = vrsqrt.pop %v84
    %v86 = vld [vmem:[%s1] sm:$0xf]
    %v87 = vmul.f32 %v86, %v85
    %88 = vst.msk [vmem:[%s3] sm:$0xf] %vm49, %v87
    %v89 = vld [vmem:[%s2] sm:$0xf]
    %v90 = vmul.f32 %v78, %v87
    %v91 = vsub.f32 %v89, %v90
    %92 = vst.msk [vmem:[%s4] sm:$0xf] %vm49, %v91
  $region21: #{_batchnorm2d_pallas.2} parent=0 // pred_fallthru
    _
  // Predicated region
  $region22: #{_batchnorm2d_pallas.2} parent=0 // pred_check
    _
  $region23: #{_batchnorm2d_pallas.2} parent=0 // pred_check_branch
    %94 = sbr.rel (0) target = $region25
  $region24: #{_batchnorm2d_pallas.2} parent=0 // pred_region
    _
  $region25: #{_batchnorm2d_pallas.2} parent=0 // pred_fallthru
    _
  // Predicated region
  $region26: #{_batchnorm2d_pallas.2} parent=0 // pred_check
    _
  $region27: #{_batchnorm2d_pallas.2} parent=0 // pred_check_branch
    %96 = sbr.rel (0) target = $region29
  $region28: #{_batchnorm2d_pallas.2} parent=0 // pred_region
    _
  $region29: #{_batchnorm2d_pallas.2} parent=0 // pred_fallthru
    _
  // Predicated region
  $region30: #{_batchnorm2d_pallas.2} parent=0 // pred_check
    _
  $region31: #{_batchnorm2d_pallas.2} parent=0 // pred_check_branch
    %98 = sbr.rel (0) target = $region33
  $region32: #{_batchnorm2d_pallas.2} parent=0 // pred_region
    _
  $region33: #{_batchnorm2d_pallas.2} parent=0 // pred_fallthru
    _
  // Predicated region
  $region34: #{_batchnorm2d_pallas.2} parent=0 // pred_check
    _
  $region35: #{_batchnorm2d_pallas.2} parent=0 // pred_check_branch
    %100 = sbr.rel (0) target = $region37
  $region36: #{_batchnorm2d_pallas.2} parent=0 // pred_region
    _
  $region37: #{_batchnorm2d_pallas.2} parent=0 // pred_fallthru
    _

</llo_original>
